<compile_context>
chip_gen: v7x
topology: tpu7x:2x2x1
jax: 0.10.0
libtpu: 0.0.40
codegen_flags: <defaults>
</compile_context>

<pallas_src>
import jax
import jax.numpy as jnp
from jax.experimental import pallas as pl
from jax.experimental.pallas import tpu as pltpu


def _patch_matmul_kernel(p_ref, w_ref, b_ref, o_ref):
    # p_ref: (K, TM) patch columns, w_ref: (N, K) flattened conv weight,
    # b_ref: (N, 1) bias column, o_ref: (N, TM) output columns.
    o_ref[...] = (
        jnp.dot(w_ref[...], p_ref[...], preferred_element_type=jnp.float32)
        + b_ref[...]
    ).astype(o_ref.dtype)


def patch_partition_forward(x, weight, bias, patch_h=4, patch_w=4, tile_m=2048):
    """x: (B, C, H, W) f32 NCHW. weight: (OC, C, kh, kw). bias: (OC,).

    Returns the equivalent of conv(x).transpose(0, -1): shape (W/kw, OC, H/kh, B).
    """
    B, C, H, W = x.shape
    OC = weight.shape[0]
    if H % patch_h != 0 or W % patch_w != 0:
        raise ValueError("H/W must be divisible by the patch size")
    Ho, Wo = H // patch_h, W // patch_w
    K = C * patch_h * patch_w
    N = OC
    M = Wo * Ho * B

    # --- glue: non-overlapping patches, K-order (c, kh, kw) to match the
    # Conv2d weight layout, M-order (wo, ho, b) so the single post-kernel
    # transpose is just a leading-dim swap.
    xv = x.reshape(B, C, Ho, patch_h, Wo, patch_w)
    patches = xv.transpose(1, 3, 5, 4, 2, 0).reshape(K, M)      # (K, M), lane = M

    wmat = weight.reshape(N, K)                                  # (N, K)
    bcol = bias.reshape(N, 1)                                    # (N, 1)

    # --- tile selection: lane-dense tiles along M; pad M when tiled.
    if M <= tile_m:
        tm, m_pad = M, M                       # single block == full dims (legal)
    else:
        tm = tile_m                            # multiple of 128 expected
        m_pad = ((M + tm - 1) // tm) * tm
    if m_pad != M:
        patches = jnp.pad(patches, ((0, 0), (0, m_pad - M)))

    out = pl.pallas_call(
        _patch_matmul_kernel,
        out_shape=jax.ShapeDtypeStruct((N, m_pad), jnp.float32),
        grid=(m_pad // tm,),
        in_specs=[
            pl.BlockSpec((K, tm), lambda i: (0, i)),   # patch columns, pipelined
            pl.BlockSpec((N, K), lambda i: (0, 0)),    # weight, VMEM-resident
            pl.BlockSpec((N, 1), lambda i: (0, 0)),    # bias, VMEM-resident
        ],
        out_specs=pl.BlockSpec((N, tm), lambda i: (0, i)),
        compiler_params=pltpu.CompilerParams(
            dimension_semantics=("parallel",),
            allow_input_fusion=[True, False, False],
        ),
        cost_estimate=pl.CostEstimate(
            flops=2 * M * K * N,
            transcendentals=0,
            bytes_accessed=4 * (K * M + N * K + N + N * M),
        ),
    )(patches, wmat, bcol)

    # --- glue: (N, M) -> (OC, Wo, Ho, B) -> torch's conv(x).transpose(0, -1)
    out = out[:, :M].reshape(N, Wo, Ho, B)
    return out.transpose(1, 0, 2, 3)                             # (Wo, OC, Ho, B)


def _reference_forward(x, weight, bias, patch_h=4, patch_w=4):
    """Pure-JAX reference using lax conv (correctness check)."""
    y = jax.lax.conv_general_dilated(
        x, weight,
        window_strides=(patch_h, patch_w),
        padding="VALID",
        dimension_numbers=("NCHW", "OIHW", "NCHW"),
    ) + bias.reshape(1, -1, 1, 1)
    return jnp.transpose(y, (3, 1, 2, 0))  # swap dim 0 and -1


if __name__ == "__main__":
    key = jax.random.PRNGKey(0)
    kx, kw, kb = jax.random.split(key, 3)

    patch_h, patch_w = 4, 4
    B, C, H, W = 2, 3, 16, 16
    OC = patch_h * patch_w * C  # 48

    x = jax.random.normal(kx, (B, C, H, W), dtype=jnp.float32)
    fan_in = C * patch_h * patch_w
    bound = 1.0 / (fan_in ** 0.5)
    weight = jax.random.uniform(kw, (OC, C, patch_h, patch_w),
                                dtype=jnp.float32, minval=-bound, maxval=bound)
    bias = jax.random.uniform(kb, (OC,), dtype=jnp.float32,
                              minval=-bound, maxval=bound)

    # Small shape: single-block path.
    out = jax.block_until_ready(
        patch_partition_forward(x, weight, bias, patch_h, patch_w))
    ref = _reference_forward(x, weight, bias, patch_h, patch_w)
    assert out.shape == (W // patch_w, OC, H // patch_h, B), out.shape
    assert jnp.allclose(out, ref, atol=1e-4, rtol=1e-4), "mismatch vs conv reference"

    # Slightly larger shape: exercises the tiled grid + M-padding path
    # (M = 16*16*3 = 768, tile_m = 512 -> grid of 2 with 256 padded lanes).
    B2, H2, W2 = 3, 64, 64
    x2 = jax.random.normal(kx, (B2, C, H2, W2), dtype=jnp.float32)
    out2 = jax.block_until_ready(
        patch_partition_forward(x2, weight, bias, patch_h, patch_w, tile_m=512))
    ref2 = _reference_forward(x2, weight, bias, patch_h, patch_w)
    assert out2.shape == (W2 // patch_w, OC, H2 // patch_h, B2), out2.shape
    assert jnp.allclose(out2, ref2, atol=1e-4, rtol=1e-4), "tiled path mismatch"

    print("KERNEL_OK")
</pallas_src>

<mosaic_0001>
module attributes {stable_mosaic.version = 11 : i64} {
  func.func @_patch_matmul_kernel(%arg0: i32, %arg1: memref<48x32xf32, #tpu.memory_space<vmem>>, %arg2: memref<48x48xf32, #tpu.memory_space<vmem>>, %arg3: memref<48x1xf32, #tpu.memory_space<vmem>>, %arg4: memref<48x32xf32, #tpu.memory_space<vmem>>) attributes {dimension_semantics = [#tpu.dimension_semantics<parallel>], iteration_bounds = array<i64: 1>, scalar_prefetch = 0 : i64, scratch_operands = 0 : i64, tpu.core_type = #tpu.core_type<tc>, window_params = [{transform_indices = @transform_0, window_bounds = array<i64: 48, 32>}, {pipeline_mode = #tpu.pipeline_mode<synchronous>, transform_indices = @transform_1, window_bounds = array<i64: 48, 48>}, {pipeline_mode = #tpu.pipeline_mode<synchronous>, transform_indices = @transform_2, window_bounds = array<i64: 48, 1>}, {transform_indices = @transform_3, window_bounds = array<i64: 48, 32>}]} {
    %c0 = arith.constant 0 : index
    %c0_0 = arith.constant 0 : index
    %0 = vector.load %arg2[%c0, %c0_0] : memref<48x48xf32, #tpu.memory_space<vmem>>, vector<48x48xf32>
    %c0_1 = arith.constant 0 : index
    %c0_2 = arith.constant 0 : index
    %1 = vector.load %arg1[%c0_1, %c0_2] : memref<48x32xf32, #tpu.memory_space<vmem>>, vector<48x32xf32>
    %cst = arith.constant dense<0.000000e+00> : vector<48x32xf32>
    %2 = tpu.matmul %0, %1, %cst {dimension_numbers = #tpu.dot_dimension_numbers<[1], [0], [0], [1], [0, 0, 1, 1], [], []>} : vector<48x48xf32>, vector<48x32xf32>, vector<48x32xf32> -> vector<48x32xf32>
    %c0_3 = arith.constant 0 : index
    %c0_4 = arith.constant 0 : index
    %3 = vector.load %arg3[%c0_3, %c0_4] : memref<48x1xf32, #tpu.memory_space<vmem>>, vector<48x1xf32>
    %4 = vector.broadcast %3 : vector<48x1xf32> to vector<48x32xf32>
    %5 = arith.addf %2, %4 : vector<48x32xf32>
    %c0_5 = arith.constant 0 : index
    %c0_6 = arith.constant 0 : index
    %6 = vector.load %arg4[%c0_5, %c0_6] : memref<48x32xf32, #tpu.memory_space<vmem>>, vector<48x32xf32>
    tpu.vector_store %arg4[%c0_5, %c0_6], %5 {strides = array<i32>} : memref<48x32xf32, #tpu.memory_space<vmem>>, vector<48x32xf32>,
    return
  }
  func.func @transform_0(%arg0: i32) -> (i32, i32) {
    %c0_i32 = arith.constant 0 : i32
    %c0_i32_0 = arith.constant 0 : i32
    return %c0_i32, %arg0 : i32, i32
  }
  func.func @transform_1(%arg0: i32) -> (i32, i32) {
    %c0_i32 = arith.constant 0 : i32
    %c0_i32_0 = arith.constant 0 : i32
    %c0_i32_1 = arith.constant 0 : i32
    return %c0_i32, %c0_i32_0 : i32, i32
  }
  func.func @transform_2(%arg0: i32) -> (i32, i32) {
    %c0_i32 = arith.constant 0 : i32
    %c0_i32_0 = arith.constant 0 : i32
    %c0_i32_1 = arith.constant 0 : i32
    return %c0_i32, %c0_i32_0 : i32, i32
  }
  func.func @transform_3(%arg0: i32) -> (i32, i32) {
    %c0_i32 = arith.constant 0 : i32
    %c0_i32_0 = arith.constant 0 : i32
    return %c0_i32, %arg0 : i32, i32
  }
}

</mosaic_0001>

<llo_original>
// kernel: tpu_custom_call.1
$region0: #{tpu_custom_call.1}
  #allocation0 [shape = 'u32[]', space=smem, size = 0x4, offset = 0x4, fixed_abs, tag = 'smem constant byte address 0x4 - core index']
  #allocation1 [shape = 'u32[144,128]{1,0:T(1,128)}', space=vmem, size = 0x12000, scoped, tag = 'internal scratch']
  %s0 = inlined_call_operand.vmem [shape: f32[48,32], index: 0, kind: input, shape index: {}]
  %s1 = inlined_call_operand.vmem [shape: f32[48,48], index: 1, kind: input, shape index: {}]
  %s2 = inlined_call_operand.vmem [shape: f32[48,1], index: 2, kind: input, shape index: {}]
  %s3 = inlined_call_operand.vmem [shape: f32[48,32], index: 3, kind: output, shape index: {}]
  %s4 = sld [smem:[#allocation0]]
  $region22: #{tpu_custom_call.1} parent=0
    _
  %s6 = ssub.s32 1, %s4
  %s7 = scalar_select 0, %s6, %s4
  // Predicated region
  $region2: #{tpu_custom_call.1} parent=0 // pred_check
    _
  $region3: #{tpu_custom_call.1} parent=0 // pred_check_branch
    %9 = sbr.rel (0) target = $region5
  $region4: #{tpu_custom_call.1} parent=0 // pred_region
    _
  $region5: #{tpu_custom_call.1} parent=0 // pred_fallthru
    _
  // Predicated region
  $region6: #{tpu_custom_call.1} parent=0 // pred_check
    _
  $region7: #{tpu_custom_call.1} parent=0 // pred_check_branch
    %11 = sbr.rel (0) target = $region9
  $region8: #{tpu_custom_call.1} parent=0 // pred_region
    _
  $region9: #{tpu_custom_call.1} parent=0 // pred_fallthru
    _
  // Predicated region
  $region10: #{tpu_custom_call.1} parent=0 // pred_check
    _
  $region11: #{tpu_custom_call.1} parent=0 // pred_check_branch
    %13 = sbr.rel (0) target = $region13
  $region12: #{tpu_custom_call.1} parent=0 // pred_region
    _
  $region13: #{tpu_custom_call.1} parent=0 // pred_fallthru
    _
  %v14 = vld [vmem:[%s1] sm:$0xff]
  %v15 = vld [vmem:[%s1 + $0x8] sm:$0xff]
  %v16 = vld [vmem:[%s1 + $0x10] sm:$0xff]
  %v17 = vld [vmem:[%s1 + $0x18] sm:$0xff]
  %v18 = vld [vmem:[%s1 + $0x20] sm:$0xff]
  %v19 = vld [vmem:[%s1 + $0x28] sm:$0xff]
  %v20 = vld [vmem:[%s0] sm:$0xff]
  %v21 = vld [vmem:[%s0 + $0x8] sm:$0xff]
  %v22 = vld [vmem:[%s0 + $0x10] sm:$0xff]
  %v23 = vld [vmem:[%s0 + $0x18] sm:$0xff]
  %v24 = vld [vmem:[%s0 + $0x20] sm:$0xff]
  %v25 = vld [vmem:[%s0 + $0x28] sm:$0xff]
  %v26 = vld [vmem:[%s2] sm:$0xff]
  %v27 = vld [vmem:[%s2 + $0x8] sm:$0xff]
  %v28 = vld [vmem:[%s2 + $0x10] sm:$0xff]
  %v29 = vld [vmem:[%s2 + $0x18] sm:$0xff]
  %v30 = vld [vmem:[%s2 + $0x20] sm:$0xff]
  %v31 = vld [vmem:[%s2 + $0x28] sm:$0xff]
  %33 = vset.pattern.permute.xlu0 0
  %34 = vperm.xlu0 %33, %v26
  %v35 = vpop.permute.xlu0 %34
  %38 = vset.pattern.permute.xlu0 0
  %39 = vperm.xlu0 %38, %v27
  %v40 = vpop.permute.xlu0 %39
  %43 = vset.pattern.permute.xlu0 0
  %44 = vperm.xlu0 %43, %v28
  %v45 = vpop.permute.xlu0 %44
  %48 = vset.pattern.permute.xlu0 0
  %49 = vperm.xlu0 %48, %v29
  %v50 = vpop.permute.xlu0 %49
  %53 = vset.pattern.permute.xlu0 0
  %54 = vperm.xlu0 %53, %v30
  %v55 = vpop.permute.xlu0 %54
  %58 = vset.pattern.permute.xlu0 0
  %59 = vperm.xlu0 %58, %v31
  %v60 = vpop.permute.xlu0 %59
  %vm62 = vcmask 392192
  %v64 = vsel %vm62, %v14, 0
  %v67 = vsel %vm62, %v15, 0
  %v70 = vsel %vm62, %v16, 0
  %v73 = vsel %vm62, %v17, 0
  %v76 = vsel %vm62, %v18, 0
  %v79 = vsel %vm62, %v19, 0
  %81 = vmatprep.subr.mxu0 0.0
  %82 = vmatpush1.msra.mxu0 %v20
  %83 = vmatprep.subr.mxu0 0.0
  %84 = vmatpush1.msra.mxu0 %v21
  %85 = vmatprep.subr.mxu0 0.0
  %86 = vmatpush1.msra.mxu0 %v22
  %87 = vmatprep.subr.mxu0 0.0
  %88 = vmatpush1.msra.mxu0 %v23
  %89 = vmatprep.subr.mxu0 0.0
  %90 = vmatpush1.msra.mxu0 %v24
  %91 = vmatprep.subr.mxu0 0.0
  %92 = vmatpush1.msra.mxu0 %v25
  %93 = vmatprep.subr.mxu0 0.0
  %94 = vmatpush1.msra.mxu0 0.0
  %95 = vmatprep.subr.mxu0 0.0
  %96 = vmatpush1.msra.mxu0 0.0
  %97 = vmatprep.subr.mxu0 0.0
  %98 = vmatpush1.msra.mxu0 0.0
  %99 = vmatprep.subr.mxu0 0.0
  %100 = vmatpush1.msra.mxu0 0.0
  %101 = vmatprep.subr.mxu0 0.0
  %102 = vmatpush1.msra.mxu0 0.0
  %103 = vmatprep.subr.mxu0 0.0
  %104 = vmatpush1.msra.mxu0 0.0
  %105 = vmatprep.subr.mxu0 0.0
  %106 = vmatpush1.msra.mxu0 0.0
  %107 = vmatprep.subr.mxu0 0.0
  %108 = vmatpush1.msra.mxu0 0.0
  %109 = vmatprep.subr.mxu0 0.0
  %110 = vmatpush1.msra.mxu0 0.0
  %111 = vmatprep.subr.mxu0 0.0
  %112 = vmatpush1.msra.mxu0 0.0
  %113 = vmatprep.subr.mxu0 0.0
  %114 = vmatpush1.msra.mxu0 0.0
  %115 = vmatprep.subr.mxu0 0.0
  %116 = vmatpush1.msra.mxu0 0.0
  %117 = vmatprep.subr.mxu0 0.0
  %118 = vmatpush1.msra.mxu0 0.0
  %119 = vmatprep.subr.mxu0 0.0
  %120 = vmatpush1.msra.mxu0 0.0
  %121 = vmatprep.subr.mxu0 0.0
  %122 = vmatpush1.msra.mxu0 0.0
  %123 = vmatprep.subr.mxu0 0.0
  %124 = vmatpush1.msra.mxu0 0.0
  %125 = vmatprep.subr.mxu0 0.0
  %126 = vmatpush1.msra.mxu0 0.0
  %127 = vmatprep.subr.mxu0 0.0
  %128 = vmatpush1.msra.mxu0 0.0
  %129 = vmatprep.subr.mxu0 0.0
  %130 = vmatpush1.msra.mxu0 0.0
  %131 = vmatprep.subr.mxu0 0.0
  %132 = vmatpush1.msra.mxu0 0.0
  %133 = vmatprep.subr.mxu0 0.0
  %134 = vmatpush1.msra.mxu0 0.0
  %135 = vmatprep.subr.mxu0 0.0
  %136 = vmatpush1.msra.mxu0 0.0
  %137 = vmatprep.subr.mxu0 0.0
  %138 = vmatpush1.msra.mxu0 0.0
  %139 = vmatprep.subr.mxu0 0.0
  %140 = vmatpush1.msra.mxu0 0.0
  %141 = vmatprep.subr.mxu0 0.0
  %142 = vmatpush1.msra.mxu0 0.0
  %143 = vmatprep.subr.mxu0 0.0
  %144 = vmatpush1.msra.mxu0 0.0
  %145 = vmatprep.mubr.f32.mxu0 0.0
  %146 = vmatmul.mubr.f32.gmra.mrb[0].mxu0 %v64
  %v147 = vpop.f32.mrb[0].mxu0
  %v148 = vadd.f32 %v35, %v147
  %v149 = vpop.f32.mrb[0].mxu0
  %150 = vmatprep.mubr.f32.mxu0 0.0
  %151 = vmatmul.mubr.f32.gmra.mrb[0].mxu0 %v67
  %v152 = vpop.f32.mrb[0].mxu0
  %v153 = vadd.f32 %v40, %v152
  %v154 = vpop.f32.mrb[0].mxu0
  %155 = vmatprep.mubr.f32.mxu0 0.0
  %156 = vmatmul.mubr.f32.gmra.mrb[0].mxu0 %v70
  %v157 = vpop.f32.mrb[0].mxu0
  %v158 = vadd.f32 %v45, %v157
  %v159 = vpop.f32.mrb[0].mxu0
  %160 = vmatprep.mubr.f32.mxu0 0.0
  %161 = vmatmul.mubr.f32.gmra.mrb[0].mxu0 %v73
  %v162 = vpop.f32.mrb[0].mxu0
  %v163 = vadd.f32 %v50, %v162
  %v164 = vpop.f32.mrb[0].mxu0
  %165 = vmatprep.mubr.f32.mxu0 0.0
  %166 = vmatmul.mubr.f32.gmra.mrb[0].mxu0 %v76
  %v167 = vpop.f32.mrb[0].mxu0
  %v168 = vadd.f32 %v55, %v167
  %v169 = vpop.f32.mrb[0].mxu0
  %170 = vmatprep.mubr.f32.mxu0 0.0
  %171 = vmatmul.mubr.f32.gmra.mrb[0].mxu0 %v79
  %v172 = vpop.f32.mrb[0].mxu0
  %v173 = vadd.f32 %v60, %v172
  %v174 = vpop.f32.mrb[0].mxu0
  %175 = vdwg.mxu0
  %vm176 = vcmask 261120
  %177 = vst.msk [vmem:[%s3] sm:$0xff] %vm176, %v148
  %178 = vst.msk [vmem:[%s3 + $0x8] sm:$0xff] %vm176, %v153
  %179 = vst.msk [vmem:[%s3 + $0x10] sm:$0xff] %vm176, %v158
  %180 = vst.msk [vmem:[%s3 + $0x18] sm:$0xff] %vm176, %v163
  %181 = vst.msk [vmem:[%s3 + $0x20] sm:$0xff] %vm176, %v168
  %182 = vst.msk [vmem:[%s3 + $0x28] sm:$0xff] %vm176, %v173
  // Predicated region
  $region14: #{tpu_custom_call.1} parent=0 // pred_check
    _
  $region15: #{tpu_custom_call.1} parent=0 // pred_check_branch
    %184 = sbr.rel (0) target = $region17
  $region16: #{tpu_custom_call.1} parent=0 // pred_region
    _
  $region17: #{tpu_custom_call.1} parent=0 // pred_fallthru
    _
  // Predicated region
  $region18: #{tpu_custom_call.1} parent=0 // pred_check
    _
  $region19: #{tpu_custom_call.1} parent=0 // pred_check_branch
    %186 = sbr.rel (0) target = $region21
  $region20: #{tpu_custom_call.1} parent=0 // pred_region
    _
  $region21: #{tpu_custom_call.1} parent=0 // pred_fallthru
    _

</llo_original>
